<compile_context>
chip_gen: v5e
topology: v5e:2x2
jax: 0.10.0
libtpu: 0.0.40
codegen_flags: <defaults>
</compile_context>

<pallas_src>
import jax
import jax.numpy as jnp
from jax.experimental import pallas as pl
from jax.experimental.pallas import tpu as pltpu

EPS = 1000000.0   # matches LayerNorm(features, eps=1000000.0)
_SUBLANE = 16     # row-tile multiple safe for both f32 (8) and bf16 (16) activation tiles


def _sublayer_connection_kernel(x_ref, p_ref, w_ref, o_ref):
    # x_ref: [bm, D] activation tile; p_ref: [3, D] f32 rows (a2, b2, bias); w_ref: [D, D] bf16.
    x = x_ref[...].astype(jnp.float32)
    D = x.shape[-1]
    a2 = p_ref[0:1, :]
    b2 = p_ref[1:2, :]
    bias = p_ref[2:3, :]

    # ---- LayerNorm (torch semantics: unbiased std, eps added to the std) ----
    mean = jnp.mean(x, axis=-1, keepdims=True)
    centered = x - mean
    var_unbiased = jnp.sum(centered * centered, axis=-1, keepdims=True) / (D - 1)
    std = jnp.sqrt(var_unbiased)
    inv = pl.reciprocal(std + EPS, approx=True)           # [bm, 1], EUP slot (nearly free)
    normed = a2 * (centered * inv) + b2

    # ---- sublayer: Linear(size, size) on the MXU (bf16 operands, f32 accumulation) ----
    sub = jnp.dot(normed.astype(jnp.bfloat16), w_ref[...],
                  preferred_element_type=jnp.float32) + bias

    # ---- dropout (eval mode = identity) + residual ----
    o_ref[...] = (x + sub).astype(o_ref.dtype)


def _round_up(n, m):
    return ((n + m - 1) // m) * m


def _pick_block_m(M, D, act_bytes, vmem_budget, w_buffers, bm_cap):
    """Largest row tile (multiple of 16, <= bm_cap) whose buffers fit the VMEM budget."""
    resident = w_buffers * (D * D * 2 + 3 * D * 4)        # weight + merged param block
    per_row = 2 * 2 * D * act_bytes                       # double-buffered x tile + out tile
    avail = max(vmem_budget - resident, _SUBLANE * per_row)
    bm = min(avail // per_row, bm_cap, _round_up(M, _SUBLANE))
    return max(_SUBLANE, (bm // _SUBLANE) * _SUBLANE)


def _build_call(M, D, bm, out_dtype, single_buffer_weights, vmem_limit, cost):
    pipeline_mode = pl.Buffered(1) if single_buffer_weights else None
    grid = (pl.cdiv(M, bm),)
    return pl.pallas_call(
        _sublayer_connection_kernel,
        out_shape=jax.ShapeDtypeStruct((M, D), out_dtype),
        grid_spec=pltpu.PrefetchScalarGridSpec(
            num_scalar_prefetch=0,
            grid=grid,
            in_specs=[
                pl.BlockSpec((bm, D), lambda i: (i, 0)),          # x tile (pipelined over rows)
                pl.BlockSpec((3, D), lambda i: (0, 0),            # (a2, b2, bias) resident
                             pipeline_mode=pipeline_mode),
                pl.BlockSpec((D, D), lambda i: (0, 0),            # W resident (bf16)
                             pipeline_mode=pipeline_mode),
            ],
            out_specs=pl.BlockSpec((bm, D), lambda i: (i, 0)),
        ),
        compiler_params=pltpu.CompilerParams(
            dimension_semantics=("parallel",),   # row tiles independent -> megacore on v7x
            vmem_limit_bytes=vmem_limit,
        ),
        cost_estimate=cost,
    )


def sublayer_connection(x, a2, b2, w, bias, *, block_m=None):
    """x: [B, S, D]; a2, b2, bias: [D]; w: [D, D] -> [B, S, D]."""
    B, S, D = x.shape
    assert D > 1, "unbiased std (ddof=1) requires at least 2 features"
    M = B * S

    x2d = x.reshape(M, D)
    params = jnp.stack([a2, b2, bias]).astype(jnp.float32)   # (3, D) merged resident block
    w_bf16 = w.astype(jnp.bfloat16)                          # half the weight HBM/VMEM traffic

    act_bytes = x2d.dtype.itemsize

    # Generation-aware VMEM budget: ~82% of the per-core capacity leaves Mosaic headroom
    # (internal scratch / semaphores). Falls back to a conservative 64 MiB if unqueryable.
    try:
        vmem_cap = int(pltpu.get_tpu_info().vmem_capacity_bytes)
    except Exception:
        vmem_cap = 64 * 1024 * 1024
    vmem_budget = int(vmem_cap * 0.82)

    bm_cap = block_m if block_m is not None else 1024

    def _run(single_buffer_weights):
        w_buffers = 1 if single_buffer_weights else 2
        bm = _pick_block_m(M, D, act_bytes, vmem_budget, w_buffers, bm_cap)
        needed = (w_buffers * (D * D * 2 + 3 * D * 4)
                  + 2 * 2 * bm * D * act_bytes)
        vmem_limit = min(vmem_budget,
                         max(int(needed * 1.3) + (1 << 20), 16 * 1024 * 1024))
        cost = pl.CostEstimate(
            flops=2 * M * D * D + 10 * M * D,
            transcendentals=2 * M,
            bytes_accessed=2 * M * D * act_bytes + D * D * 2 + 3 * D * 4,
        )
        call = _build_call(M, D, bm, x2d.dtype, single_buffer_weights, vmem_limit, cost)
        return call(x2d, params, w_bf16)

    try:
        out = _run(single_buffer_weights=True)
    except Exception:
        # TODO(synk): this jax build rejected pipeline_mode=pl.Buffered(1) for the resident
        # weight/param blocks; fall back to default double-buffering (slightly smaller bm).
        out = _run(single_buffer_weights=False)

    return out.reshape(B, S, D)


def _reference(x, a2, b2, w, bias):
    D = x.shape[-1]
    mean = jnp.mean(x, axis=-1, keepdims=True)
    c = x - mean
    std = jnp.sqrt(jnp.sum(c * c, axis=-1, keepdims=True) / (D - 1))
    normed = a2 * c / (std + EPS) + b2
    return x + (normed @ w + bias)


if __name__ == "__main__":
    key = jax.random.PRNGKey(0)

    def run_case(B, S, D, block_m=None):
        kx, kw, kb = jax.random.split(jax.random.fold_in(key, B * 10000 + S * 100 + D), 3)
        x = jax.random.normal(kx, (B, S, D), dtype=jnp.float32)
        # LayerNorm init per the module: a2 = ones, b2 = zeros. Linear: small random.
        a2 = jnp.ones((D,), dtype=jnp.float32)
        b2 = jnp.zeros((D,), dtype=jnp.float32)
        w = jax.random.normal(kw, (D, D), dtype=jnp.float32) * 0.02
        bias = jax.random.normal(kb, (D,), dtype=jnp.float32) * 0.02

        out = jax.block_until_ready(
            sublayer_connection(x, a2, b2, w, bias, block_m=block_m))
        ref = _reference(x, a2, b2, w, bias)
        assert out.shape == (B, S, D)
        assert jnp.allclose(out, ref, atol=1e-5, rtol=1e-5), f"mismatch (B={B},S={S},D={D})"

    # Toy shape from the module spec (single grid step, auto-sized row tile).
    run_case(B=2, S=8, D=32)
    # Lane-dense D=128 with a non-tile-aligned row count (M=200, bm=64): exercises the
    # multi-step cdiv grid + bounded boundary-tile DMA path (no host-side pad/slice).
    run_case(B=2, S=100, D=128, block_m=64)

    print("KERNEL_OK")
</pallas_src>

<mosaic_0001>
module attributes {stable_mosaic.version = 11 : i64} {
  func.func @_sublayer_connection_kernel(%arg0: i32, %arg1: memref<16x32xf32, #tpu.memory_space<vmem>>, %arg2: memref<3x32xf32, #tpu.memory_space<vmem>>, %arg3: memref<32x32xbf16, #tpu.memory_space<vmem>>, %arg4: memref<16x32xf32, #tpu.memory_space<vmem>>) attributes {dimension_semantics = [#tpu.dimension_semantics<parallel>], iteration_bounds = array<i64: 1>, scalar_prefetch = 0 : i64, scratch_operands = 0 : i64, tpu.core_type = #tpu.core_type<tc>, window_params = [{transform_indices = @transform_0, window_bounds = array<i64: 16, 32>}, {pipeline_mode = #tpu.pipeline_mode<synchronous>, transform_indices = @transform_1, window_bounds = array<i64: 3, 32>}, {pipeline_mode = #tpu.pipeline_mode<synchronous>, transform_indices = @transform_2, window_bounds = array<i64: 32, 32>}, {transform_indices = @transform_3, window_bounds = array<i64: 16, 32>}]} {
    %c0 = arith.constant 0 : index
    %c0_0 = arith.constant 0 : index
    %0 = vector.load %arg1[%c0, %c0_0] : memref<16x32xf32, #tpu.memory_space<vmem>>, vector<16x32xf32>
    %c0_1 = arith.constant 0 : index
    %c0_2 = arith.constant 0 : index
    %1 = vector.load %arg2[%c0_1, %c0_2] : memref<3x32xf32, #tpu.memory_space<vmem>>, vector<1x32xf32>
    %c1 = arith.constant 1 : index
    %c0_3 = arith.constant 0 : index
    %2 = vector.load %arg2[%c1, %c0_3] : memref<3x32xf32, #tpu.memory_space<vmem>>, vector<1x32xf32>
    %c2 = arith.constant 2 : index
    %c0_4 = arith.constant 0 : index
    %3 = vector.load %arg2[%c2, %c0_4] : memref<3x32xf32, #tpu.memory_space<vmem>>, vector<1x32xf32>
    %cst = arith.constant dense<0.000000e+00> : vector<16xf32>
    %4 = vector.multi_reduction <add>, %0, %cst [1] : vector<16x32xf32> to vector<16xf32>
    %5 = vector.shape_cast %4 : vector<16xf32> to vector<16x1xf32>
    %cst_5 = arith.constant 3.200000e+01 : f32
    %6 = vector.broadcast %cst_5 : f32 to vector<16x1xf32>
    %7 = arith.divf %5, %6 : vector<16x1xf32>
    %8 = vector.broadcast %7 : vector<16x1xf32> to vector<16x32xf32>
    %9 = arith.subf %0, %8 : vector<16x32xf32>
    %10 = arith.mulf %9, %9 : vector<16x32xf32>
    %cst_6 = arith.constant dense<0.000000e+00> : vector<16xf32>
    %11 = vector.multi_reduction <add>, %10, %cst_6 [1] : vector<16x32xf32> to vector<16xf32>
    %12 = vector.shape_cast %11 : vector<16xf32> to vector<16x1xf32>
    %cst_7 = arith.constant 3.100000e+01 : f32
    %13 = vector.broadcast %cst_7 : f32 to vector<16x1xf32>
    %14 = arith.divf %12, %13 : vector<16x1xf32>
    %15 = math.sqrt %14 : vector<16x1xf32>
    %cst_8 = arith.constant 1.000000e+06 : f32
    %16 = vector.broadcast %cst_8 : f32 to vector<16x1xf32>
    %17 = arith.addf %15, %16 : vector<16x1xf32>
    %18 = tpu.reciprocal %17 {approx = true} : vector<16x1xf32> -> vector<16x1xf32>
    %19 = vector.broadcast %18 : vector<16x1xf32> to vector<16x32xf32>
    %20 = arith.mulf %9, %19 : vector<16x32xf32>
    %21 = vector.broadcast %1 : vector<1x32xf32> to vector<16x32xf32>
    %22 = arith.mulf %21, %20 : vector<16x32xf32>
    %23 = vector.broadcast %2 : vector<1x32xf32> to vector<16x32xf32>
    %24 = arith.addf %22, %23 : vector<16x32xf32>
    %25 = arith.truncf %24 : vector<16x32xf32> to vector<16x32xbf16>
    %c0_9 = arith.constant 0 : index
    %c0_10 = arith.constant 0 : index
    %26 = vector.load %arg3[%c0_9, %c0_10] : memref<32x32xbf16, #tpu.memory_space<vmem>>, vector<32x32xbf16>
    %cst_11 = arith.constant dense<0.000000e+00> : vector<16x32xf32>
    %27 = tpu.matmul %25, %26, %cst_11 {dimension_numbers = #tpu.dot_dimension_numbers<[1], [0], [0], [1], [0, 0, 1, 1], [], []>} : vector<16x32xbf16>, vector<32x32xbf16>, vector<16x32xf32> -> vector<16x32xf32>
    %28 = vector.broadcast %3 : vector<1x32xf32> to vector<16x32xf32>
    %29 = arith.addf %27, %28 : vector<16x32xf32>
    %30 = arith.addf %0, %29 : vector<16x32xf32>
    %c0_12 = arith.constant 0 : index
    %c0_13 = arith.constant 0 : index
    %31 = vector.load %arg4[%c0_12, %c0_13] : memref<16x32xf32, #tpu.memory_space<vmem>>, vector<16x32xf32>
    tpu.vector_store %arg4[%c0_12, %c0_13], %30 {strides = array<i32>} : memref<16x32xf32, #tpu.memory_space<vmem>>, vector<16x32xf32>,
    return
  }
  func.func @transform_0(%arg0: i32) -> (i32, i32) {
    %c0_i32 = arith.constant 0 : i32
    %c0_i32_0 = arith.constant 0 : i32
    return %arg0, %c0_i32 : i32, i32
  }
  func.func @transform_1(%arg0: i32) -> (i32, i32) {
    %c0_i32 = arith.constant 0 : i32
    %c0_i32_0 = arith.constant 0 : i32
    %c0_i32_1 = arith.constant 0 : i32
    return %c0_i32, %c0_i32_0 : i32, i32
  }
  func.func @transform_2(%arg0: i32) -> (i32, i32) {
    %c0_i32 = arith.constant 0 : i32
    %c0_i32_0 = arith.constant 0 : i32
    %c0_i32_1 = arith.constant 0 : i32
    return %c0_i32, %c0_i32_0 : i32, i32
  }
  func.func @transform_3(%arg0: i32) -> (i32, i32) {
    %c0_i32 = arith.constant 0 : i32
    %c0_i32_0 = arith.constant 0 : i32
    return %arg0, %c0_i32 : i32, i32
  }
}

module attributes {stable_mosaic.version = 11 : i64} {
  func.func @_sublayer_connection_kernel(%arg0: i32, %arg1: memref<16x32xf32, #tpu.memory_space<vmem>>, %arg2: memref<3x32xf32, #tpu.memory_space<vmem>>, %arg3: memref<32x32xbf16, #tpu.memory_space<vmem>>, %arg4: memref<16x32xf32, #tpu.memory_space<vmem>>) attributes {dimension_semantics = [#tpu.dimension_semantics<parallel>], iteration_bounds = array<i64: 1>, scalar_prefetch = 0 : i64, scratch_operands = 0 : i64, tpu.core_type = #tpu.core_type<tc>, window_params = [{transform_indices = @transform_0, window_bounds = array<i64: 16, 32>}, {pipeline_mode = #tpu.pipeline_mode<synchronous>, transform_indices = @transform_1, window_bounds = array<i64: 3, 32>}, {pipeline_mode = #tpu.pipeline_mode<synchronous>, transform_indices = @transform_2, window_bounds = array<i64: 32, 32>}, {transform_indices = @transform_3, window_bounds = array<i64: 16, 32>}]} {
    %c0 = arith.constant 0 : index
    %c0_0 = arith.constant 0 : index
    %0 = vector.load %arg1[%c0, %c0_0] : memref<16x32xf32, #tpu.memory_space<vmem>>, vector<16x32xf32>
    %c0_1 = arith.constant 0 : index
    %c0_2 = arith.constant 0 : index
    %1 = vector.load %arg2[%c0_1, %c0_2] : memref<3x32xf32, #tpu.memory_space<vmem>>, vector<1x32xf32>
    %c1 = arith.constant 1 : index
    %c0_3 = arith.constant 0 : index
    %2 = vector.load %arg2[%c1, %c0_3] : memref<3x32xf32, #tpu.memory_space<vmem>>, vector<1x32xf32>
    %c2 = arith.constant 2 : index
    %c0_4 = arith.constant 0 : index
    %3 = vector.load %arg2[%c2, %c0_4] : memref<3x32xf32, #tpu.memory_space<vmem>>, vector<1x32xf32>
    %cst = arith.constant dense<0.000000e+00> : vector<16xf32>
    %4 = vector.multi_reduction <add>, %0, %cst [1] : vector<16x32xf32> to vector<16xf32>
    %5 = vector.shape_cast %4 : vector<16xf32> to vector<16x1xf32>
    %cst_5 = arith.constant 3.200000e+01 : f32
    %6 = vector.broadcast %cst_5 : f32 to vector<16x1xf32>
    %7 = arith.divf %5, %6 : vector<16x1xf32>
    %8 = vector.broadcast %7 : vector<16x1xf32> to vector<16x32xf32>
    %9 = arith.subf %0, %8 : vector<16x32xf32>
    %10 = arith.mulf %9, %9 : vector<16x32xf32>
    %cst_6 = arith.constant dense<0.000000e+00> : vector<16xf32>
    %11 = vector.multi_reduction <add>, %10, %cst_6 [1] : vector<16x32xf32> to vector<16xf32>
    %12 = vector.shape_cast %11 : vector<16xf32> to vector<16x1xf32>
    %cst_7 = arith.constant 3.100000e+01 : f32
    %13 = vector.broadcast %cst_7 : f32 to vector<16x1xf32>
    %14 = arith.divf %12, %13 : vector<16x1xf32>
    %15 = math.sqrt %14 : vector<16x1xf32>
    %cst_8 = arith.constant 1.000000e+06 : f32
    %16 = vector.broadcast %cst_8 : f32 to vector<16x1xf32>
    %17 = arith.addf %15, %16 : vector<16x1xf32>
    %18 = tpu.reciprocal %17 {approx = true} : vector<16x1xf32> -> vector<16x1xf32>
    %19 = vector.broadcast %18 : vector<16x1xf32> to vector<16x32xf32>
    %20 = arith.mulf %9, %19 : vector<16x32xf32>
    %21 = vector.broadcast %1 : vector<1x32xf32> to vector<16x32xf32>
    %22 = arith.mulf %21, %20 : vector<16x32xf32>
    %23 = vector.broadcast %2 : vector<1x32xf32> to vector<16x32xf32>
    %24 = arith.addf %22, %23 : vector<16x32xf32>
    %25 = arith.truncf %24 : vector<16x32xf32> to vector<16x32xbf16>
    %c0_9 = arith.constant 0 : index
    %c0_10 = arith.constant 0 : index
    %26 = vector.load %arg3[%c0_9, %c0_10] : memref<32x32xbf16, #tpu.memory_space<vmem>>, vector<32x32xbf16>
    %cst_11 = arith.constant dense<0.000000e+00> : vector<16x32xf32>
    %27 = tpu.matmul %25, %26, %cst_11 {dimension_numbers = #tpu.dot_dimension_numbers<[1], [0], [0], [1], [0, 0, 1, 1], [], []>} : vector<16x32xbf16>, vector<32x32xbf16>, vector<16x32xf32> -> vector<16x32xf32>
    %28 = vector.broadcast %3 : vector<1x32xf32> to vector<16x32xf32>
    %29 = arith.addf %27, %28 : vector<16x32xf32>
    %30 = arith.addf %0, %29 : vector<16x32xf32>
    %c0_12 = arith.constant 0 : index
    %c0_13 = arith.constant 0 : index
    %31 = vector.load %arg4[%c0_12, %c0_13] : memref<16x32xf32, #tpu.memory_space<vmem>>, vector<16x32xf32>
    tpu.vector_store %arg4[%c0_12, %c0_13], %30 {strides = array<i32>} : memref<16x32xf32, #tpu.memory_space<vmem>>, vector<16x32xf32>,
    return
  }
  func.func @transform_0(%arg0: i32) -> (i32, i32) {
    %c0_i32 = arith.constant 0 : i32
    %c0_i32_0 = arith.constant 0 : i32
    return %arg0, %c0_i32 : i32, i32
  }
  func.func @transform_1(%arg0: i32) -> (i32, i32) {
    %c0_i32 = arith.constant 0 : i32
    %c0_i32_0 = arith.constant 0 : i32
    %c0_i32_1 = arith.constant 0 : i32
    return %c0_i32, %c0_i32_0 : i32, i32
  }
  func.func @transform_2(%arg0: i32) -> (i32, i32) {
    %c0_i32 = arith.constant 0 : i32
    %c0_i32_0 = arith.constant 0 : i32
    %c0_i32_1 = arith.constant 0 : i32
    return %c0_i32, %c0_i32_0 : i32, i32
  }
  func.func @transform_3(%arg0: i32) -> (i32, i32) {
    %c0_i32 = arith.constant 0 : i32
    %c0_i32_0 = arith.constant 0 : i32
    return %arg0, %c0_i32 : i32, i32
  }
}

</mosaic_0001>

<llo_original>
// kernel: tpu_custom_call.1
$region0: #{tpu_custom_call.1}
  #allocation0 [shape = 'u32[]', space=smem, size = 0x4, offset = 0x4, fixed_abs, tag = 'smem constant byte address 0x4 - core index']
  #allocation1 [shape = 'u32[72,128]{1,0:T(1,128)}', space=vmem, size = 0x9000, scoped, tag = 'internal scratch']
  %s0 = inlined_call_operand.hbm [shape: f32[16,32], index: 0, kind: input, shape index: {}]
  %s1 = inlined_call_operand.hbm [shape: f32[3,32], index: 1, kind: input, shape index: {}]
  %s2 = inlined_call_operand.hbm [shape: bf16[32,32], index: 2, kind: input, shape index: {}]
  %s3 = inlined_call_operand.hbm [shape: f32[16,32], index: 3, kind: output, shape index: {}]
  %s4 = sld [smem:[#allocation0]]
  $region34: #{tpu_custom_call.1} parent=0
    _
  %s6 = ssub.s32 1, %s4
  %s7 = scalar_select 0, %s6, %s4
  $region1: #{tpu_custom_call.1} parent=0
    #allocation2 [shape = 'u8[8192]{0}', space=vmem, size = 0x2000, scoped, tag = 'input window, operand 0, single buffered']
    #allocation3 [shape = 's32[1]{0}', space=sflag, size = 0x4, scoped, tag = 'scoped memory for tpu_custom_call.1']
    #allocation4 [shape = 's32[1]{0}', space=sflag, size = 0x4, scoped, tag = 'scoped memory for tpu_custom_call.1']
    #allocation5 [shape = 'u8[2048]{0}', space=vmem, size = 0x800, scoped, tag = 'input window, operand 1, single buffered']
    #allocation6 [shape = 's32[1]{0}', space=sflag, size = 0x4, scoped, tag = 'scoped memory for tpu_custom_call.1']
    #allocation7 [shape = 'u8[8192]{0}', space=vmem, size = 0x2000, scoped, tag = 'input window, operand 2, single buffered']
    #allocation8 [shape = 'u8[8192]{0}', space=vmem, size = 0x2000, scoped, tag = 'output window, operand 0, single buffered']
    %8 = vsyncpa [#allocation3], 0
    %9 = vsyncpa [#allocation6], 0
    %10 = vsyncpa [#allocation4], 0
    // Predicated region
    $region2: #{tpu_custom_call.1} parent=1 // pred_check
      _
    $region3: #{tpu_custom_call.1} parent=1 // pred_check_branch
      %12 = sbr.rel (0) target = $region5
    $region4: #{tpu_custom_call.1} parent=1 // pred_region
      %14 = vsyncadd [#allocation3], 0
      %s15 = sshll.u32 %s0, 4
      %s16 = int_to_ptr.hbm [resolvable:$true] %s15
      %s17 = sshll.u32 [#allocation2], 4
      %s18 = int_to_ptr.vmem [resolvable:$true] %s17
      %23 = dma.hbm_to_vmem [thread:$0]  %s16, 256, %s18, [#allocation3], 128, 128, 8
    $region5: #{tpu_custom_call.1} parent=1 // pred_fallthru
      _
    // Predicated region
    $region6: #{tpu_custom_call.1} parent=1 // pred_check
      _
    $region7: #{tpu_custom_call.1} parent=1 // pred_check_branch
      %25 = sbr.rel (0) target = $region9
    $region8: #{tpu_custom_call.1} parent=1 // pred_region
      %27 = vsyncadd [#allocation6], 0
      %s29 = sshll.u32 %s1, 4
      %s30 = int_to_ptr.hbm [resolvable:$true] %s29
      %s31 = sshll.u32 [#allocation5], 4
      %s32 = int_to_ptr.vmem [resolvable:$true] %s31
      %34 = dma.hbm_to_vmem [thread:$0]  %s30, 64, %s32, [#allocation6]
    $region9: #{tpu_custom_call.1} parent=1 // pred_fallthru
      _
    // Predicated region
    $region10: #{tpu_custom_call.1} parent=1 // pred_check
      _
    $region11: #{tpu_custom_call.1} parent=1 // pred_check_branch
      %36 = sbr.rel (0) target = $region13
    $region12: #{tpu_custom_call.1} parent=1 // pred_region
      %38 = vsyncadd [#allocation6], 0
      %s39 = sshll.u32 %s2, 4
      %s40 = int_to_ptr.hbm [resolvable:$true] %s39
      %s41 = sshll.u32 [#allocation7], 4
      %s42 = int_to_ptr.vmem [resolvable:$true] %s41
      %47 = dma.hbm_to_vmem [thread:$0]  %s40, 256, %s42, [#allocation6], 64, 64, 4
    $region13: #{tpu_custom_call.1} parent=1 // pred_fallthru
      _
    // Predicated region
    $region14: #{tpu_custom_call.1} parent=1 // pred_check
      _
    $region15: #{tpu_custom_call.1} parent=1 // pred_check_branch
      %49 = sbr.rel (0) target = $region17
    $region16: #{tpu_custom_call.1} parent=1 // pred_region
      %51 = dma.done [#allocation3], 256
    $region17: #{tpu_custom_call.1} parent=1 // pred_fallthru
      _
    // Predicated region
    $region18: #{tpu_custom_call.1} parent=1 // pred_check
      _
    $region19: #{tpu_custom_call.1} parent=1 // pred_check_branch
      %53 = sbr.rel (0) target = $region21
    $region20: #{tpu_custom_call.1} parent=1 // pred_region
      %55 = dma.done [#allocation6], 64
    $region21: #{tpu_custom_call.1} parent=1 // pred_fallthru
      _
    // Predicated region
    $region22: #{tpu_custom_call.1} parent=1 // pred_check
      _
    $region23: #{tpu_custom_call.1} parent=1 // pred_check_branch
      %57 = sbr.rel (0) target = $region25
    $region24: #{tpu_custom_call.1} parent=1 // pred_region
      %59 = dma.done [#allocation6], 256
    $region25: #{tpu_custom_call.1} parent=1 // pred_fallthru
      _
    %v61 = vld [vmem:[#allocation2] sm:$0xff]
    %v62 = vld [vmem:[#allocation2 + $0x8] sm:$0xff]
    %v63 = vld [vmem:[#allocation5] sm:$0x1]
    %v64 = vld [vmem:[#allocation5 + $0x1] sm:$0x1]
    %v65 = vld [vmem:[#allocation5 + $0x2] sm:$0x1]
    %vm66 = vcmask 261120
    %v67 = vsel %vm66, %v61, 0.0
    %68 = vadd.xlane.f32.xlu0 %v67
    %v69 = vpop.xlane.xlu0 %68
    %v70 = vsel %vm66, %v62, 0.0
    %71 = vadd.xlane.f32.xlu0 %v70
    %v72 = vpop.xlane.xlu0 %71
    %v73 = vrcp.pop 32.0
    %v74 = vmul.f32 32.0, %v73
    %v75 = vsub.f32 1.0, %v74
    %v76 = vmul.f32 %v73, %v75
    %v77 = vadd.f32 %v73, %v76
    %vm78 = vweird.f32 %v73
    %v79 = vsel %vm78, %v73, %v77
    %v80 = vmul.f32 %v69, %v79
    %v81 = vmul.f32 %v72, %v79
    %v82 = vsub.f32 %v61, %v80
    %v83 = vsub.f32 %v62, %v81
    %v84 = vmul.f32 %v82, %v82
    %v85 = vmul.f32 %v83, %v83
    %v86 = vsel %vm66, %v84, 0.0
    %87 = vadd.xlane.f32.xlu0 %v86
    %v88 = vpop.xlane.xlu0 %87
    %v89 = vsel %vm66, %v85, 0.0
    %90 = vadd.xlane.f32.xlu0 %v89
    %v91 = vpop.xlane.xlu0 %90
    %v92 = vrcp.pop 31.0
    %v93 = vmul.f32 31.0, %v92
    %v94 = vsub.f32 1.0, %v93
    %v95 = vmul.f32 %v92, %v94
    %v96 = vadd.f32 %v92, %v95
    %vm97 = vweird.f32 %v92
    %v98 = vsel %vm97, %v92, %v96
    %v99 = vmul.f32 %v88, %v98
    %v100 = vmul.f32 %v91, %v98
    %v101 = vrsqrt.pop %v99
    %v102 = vmul.f32 %v101, %v99
    %v103 = vmul.f32 %v102, %v101
    %v104 = vmul.f32 0.5, %v103
    %v105 = vsub.f32 1.5, %v104
    %v106 = vmul.f32 %v101, %v105
    %v107 = vmul.f32 %v99, %v106
    %vm108 = vcmp.eq.f32.partialorder %v99, inf
    %v109 = vsel %vm108, %v99, %v107
    %vm110 = vcmp.eq.f32.partialorder %v99, 0.0
    %v111 = vand.u32 %v99, 2147483648
    %v112 = vsel %vm110, %v111, %v109
    %v113 = vrsqrt.pop %v100
    %v114 = vmul.f32 %v113, %v100
    %v115 = vmul.f32 %v114, %v113
    %v116 = vmul.f32 0.5, %v115
    %v117 = vsub.f32 1.5, %v116
    %v118 = vmul.f32 %v113, %v117
    %v119 = vmul.f32 %v100, %v118
    %vm120 = vcmp.eq.f32.partialorder %v100, inf
    %v121 = vsel %vm120, %v100, %v119
    %vm122 = vcmp.eq.f32.partialorder %v100, 0.0
    %v123 = vand.u32 %v100, 2147483648
    %v124 = vsel %vm122, %v123, %v121
    %v125 = vadd.f32 %v112, 1000000.0
    %v126 = vadd.f32 %v124, 1000000.0
    %v127 = vrcp.pop %v125
    %v128 = vrcp.pop %v126
    %v129 = vmul.f32 %v82, %v127
    %v130 = vmul.f32 %v83, %v128
    %v131 = vperm.slane %v63, 0
    %v132 = vmul.f32 %v131, %v129
    %v133 = vmul.f32 %v131, %v130
    %v134 = vperm.slane %v64, 0
    %v135 = vadd.f32 %v132, %v134
    %v136 = vadd.f32 %v133, %v134
    %v137 = vpack.c.bf16 %v136, %v135
    %v138 = vld [vmem:[#allocation7] sm:$0xf]
    %v139 = vld [vmem:[#allocation7 + $0x4] sm:$0xf]
    %v140 = vld [vmem:[#allocation7 + $0x8] sm:$0xf]
    %v141 = vld [vmem:[#allocation7 + $0xc] sm:$0xf]
    %v142 = vperm.slane %v65, 0
    %v147 = vunpack.c.l.b16 %v138
    %v148 = vunpack.c.l.b16 %v139
    %v149 = vunpack.c.l.b16 %v140
    %v150 = vunpack.c.l.b16 %v141
    %v151 = vpack.c.b16 %v148, %v147
    %v152 = vpack.c.b16 %v150, %v149
    %v156 = vsel %vm66, %v137, 0
    %158 = vmatpush.bf16.msra.mxu0 0
    %159 = vmatpush.bf16.msra.mxu0 0
    %160 = vmatpush.bf16.msra.mxu0 0
    %161 = vmatpush.bf16.msra.mxu0 0
    %162 = vmatpush.bf16.msra.mxu0 0
    %163 = vmatpush.bf16.msra.mxu0 0
    %164 = vmatpush.bf16.msra.mxu0 %v152
    %165 = vmatpush.bf16.msra.mxu0 %v151
    %166 = vmatmul.bf16.gmra.mxu0 %v156
    %v167 = vpop.f32.mrf.mxu0
    %v168 = vadd.f32 %v142, %v167
    %v169 = vpop.f32.mrf.mxu0
    %v170 = vadd.f32 %v142, %v169
    %171 = vdwg.mxu0
    %v172 = vadd.f32 %v61, %v168
    %v173 = vadd.f32 %v62, %v170
    %174 = vst.msk [vmem:[#allocation8] sm:$0xff] %vm66, %v172
    %175 = vst.msk [vmem:[#allocation8 + $0x8] sm:$0xff] %vm66, %v173
    // Predicated region
    $region26: #{tpu_custom_call.1} parent=1 // pred_check
      _
    $region27: #{tpu_custom_call.1} parent=1 // pred_check_branch
      %177 = sbr.rel (0) target = $region29
    $region28: #{tpu_custom_call.1} parent=1 // pred_region
      %179 = vsyncadd [#allocation4], 0
      %s180 = sshll.u32 [#allocation8], 4
      %s181 = int_to_ptr.vmem [resolvable:$true] %s180
      %s182 = sshll.u32 %s3, 4
      %s183 = int_to_ptr.hbm [resolvable:$true] %s182
      %188 = dma.vmem_to_hbm [thread:$0]  %s181, 256, %s183, [#allocation4], 128, 128, 8
    $region29: #{tpu_custom_call.1} parent=1 // pred_fallthru
      _
    // Predicated region
    $region30: #{tpu_custom_call.1} parent=1 // pred_check
      _
    $region31: #{tpu_custom_call.1} parent=1 // pred_check_branch
      %190 = sbr.rel (0) target = $region33
    $region32: #{tpu_custom_call.1} parent=1 // pred_region
      %192 = dma.done [#allocation4], 256
    $region33: #{tpu_custom_call.1} parent=1 // pred_fallthru
      _
    %193 = vsyncpa [#allocation3], 1
    %194 = vsyncpa [#allocation6], 1
    %195 = vsyncpa [#allocation4], 1

// kernel: tpu_custom_call.1
$region0: #{tpu_custom_call.1}
  #allocation0 [shape = 'u32[]', space=smem, size = 0x4, offset = 0x4, fixed_abs, tag = 'smem constant byte address 0x4 - core index']
  #allocation1 [shape = 'u32[72,128]{1,0:T(1,128)}', space=vmem, size = 0x9000, scoped, tag = 'internal scratch']
  %s0 = inlined_call_operand.hbm [shape: f32[16,32], index: 0, kind: input, shape index: {}]
  %s1 = inlined_call_operand.hbm [shape: f32[3,32], index: 1, kind: input, shape index: {}]
  %s2 = inlined_call_operand.hbm [shape: bf16[32,32], index: 2, kind: input, shape index: {}]
  %s3 = inlined_call_operand.hbm [shape: f32[16,32], index: 3, kind: output, shape index: {}]
  %s4 = sld [smem:[#allocation0]]
  $region34: #{tpu_custom_call.1} parent=0
    _
  %s6 = ssub.s32 1, %s4
  %s7 = scalar_select 0, %s6, %s4
  $region1: #{tpu_custom_call.1} parent=0
    #allocation2 [shape = 'u8[8192]{0}', space=vmem, size = 0x2000, scoped, tag = 'input window, operand 0, single buffered']
    #allocation3 [shape = 's32[1]{0}', space=sflag, size = 0x4, scoped, tag = 'scoped memory for tpu_custom_call.1']
    #allocation4 [shape = 's32[1]{0}', space=sflag, size = 0x4, scoped, tag = 'scoped memory for tpu_custom_call.1']
    #allocation5 [shape = 'u8[2048]{0}', space=vmem, size = 0x800, scoped, tag = 'input window, operand 1, single buffered']
    #allocation6 [shape = 's32[1]{0}', space=sflag, size = 0x4, scoped, tag = 'scoped memory for tpu_custom_call.1']
    #allocation7 [shape = 'u8[8192]{0}', space=vmem, size = 0x2000, scoped, tag = 'input window, operand 2, single buffered']
    #allocation8 [shape = 'u8[8192]{0}', space=vmem, size = 0x2000, scoped, tag = 'output window, operand 0, single buffered']
    %8 = vsyncpa [#allocation3], 0
    %9 = vsyncpa [#allocation6], 0
    %10 = vsyncpa [#allocation4], 0
    // Predicated region
    $region2: #{tpu_custom_call.1} parent=1 // pred_check
      _
    $region3: #{tpu_custom_call.1} parent=1 // pred_check_branch
      %12 = sbr.rel (0) target = $region5
    $region4: #{tpu_custom_call.1} parent=1 // pred_region
      %14 = vsyncadd [#allocation3], 0
      %s15 = sshll.u32 %s0, 4
      %s16 = int_to_ptr.hbm [resolvable:$true] %s15
      %s17 = sshll.u32 [#allocation2], 4
      %s18 = int_to_ptr.vmem [resolvable:$true] %s17
      %23 = dma.hbm_to_vmem [thread:$0]  %s16, 256, %s18, [#allocation3], 128, 128, 8
    $region5: #{tpu_custom_call.1} parent=1 // pred_fallthru
      _
    // Predicated region
    $region6: #{tpu_custom_call.1} parent=1 // pred_check
      _
    $region7: #{tpu_custom_call.1} parent=1 // pred_check_branch
      %25 = sbr.rel (0) target = $region9
    $region8: #{tpu_custom_call.1} parent=1 // pred_region
      %27 = vsyncadd [#allocation6], 0
      %s29 = sshll.u32 %s1, 4
      %s30 = int_to_ptr.hbm [resolvable:$true] %s29
      %s31 = sshll.u32 [#allocation5], 4
      %s32 = int_to_ptr.vmem [resolvable:$true] %s31
      %34 = dma.hbm_to_vmem [thread:$0]  %s30, 64, %s32, [#allocation6]
    $region9: #{tpu_custom_call.1} parent=1 // pred_fallthru
      _
    // Predicated region
    $region10: #{tpu_custom_call.1} parent=1 // pred_check
      _
    $region11: #{tpu_custom_call.1} parent=1 // pred_check_branch
      %36 = sbr.rel (0) target = $region13
    $region12: #{tpu_custom_call.1} parent=1 // pred_region
      %38 = vsyncadd [#allocation6], 0
      %s39 = sshll.u32 %s2, 4
      %s40 = int_to_ptr.hbm [resolvable:$true] %s39
      %s41 = sshll.u32 [#allocation7], 4
      %s42 = int_to_ptr.vmem [resolvable:$true] %s41
      %47 = dma.hbm_to_vmem [thread:$0]  %s40, 256, %s42, [#allocation6], 64, 64, 4
    $region13: #{tpu_custom_call.1} parent=1 // pred_fallthru
      _
    // Predicated region
    $region14: #{tpu_custom_call.1} parent=1 // pred_check
      _
    $region15: #{tpu_custom_call.1} parent=1 // pred_check_branch
      %49 = sbr.rel (0) target = $region17
    $region16: #{tpu_custom_call.1} parent=1 // pred_region
      %51 = dma.done [#allocation3], 256
    $region17: #{tpu_custom_call.1} parent=1 // pred_fallthru
      _
    // Predicated region
    $region18: #{tpu_custom_call.1} parent=1 // pred_check
      _
    $region19: #{tpu_custom_call.1} parent=1 // pred_check_branch
      %53 = sbr.rel (0) target = $region21
    $region20: #{tpu_custom_call.1} parent=1 // pred_region
      %55 = dma.done [#allocation6], 64
    $region21: #{tpu_custom_call.1} parent=1 // pred_fallthru
      _
    // Predicated region
    $region22: #{tpu_custom_call.1} parent=1 // pred_check
      _
    $region23: #{tpu_custom_call.1} parent=1 // pred_check_branch
      %57 = sbr.rel (0) target = $region25
    $region24: #{tpu_custom_call.1} parent=1 // pred_region
      %59 = dma.done [#allocation6], 256
    $region25: #{tpu_custom_call.1} parent=1 // pred_fallthru
      _
    %v61 = vld [vmem:[#allocation2] sm:$0xff]
    %v62 = vld [vmem:[#allocation2 + $0x8] sm:$0xff]
    %v63 = vld [vmem:[#allocation5] sm:$0x1]
    %v64 = vld [vmem:[#allocation5 + $0x1] sm:$0x1]
    %v65 = vld [vmem:[#allocation5 + $0x2] sm:$0x1]
    %vm66 = vcmask 261120
    %v67 = vsel %vm66, %v61, 0.0
    %68 = vadd.xlane.f32.xlu0 %v67
    %v69 = vpop.xlane.xlu0 %68
    %v70 = vsel %vm66, %v62, 0.0
    %71 = vadd.xlane.f32.xlu0 %v70
    %v72 = vpop.xlane.xlu0 %71
    %v73 = vrcp.pop 32.0
    %v74 = vmul.f32 32.0, %v73
    %v75 = vsub.f32 1.0, %v74
    %v76 = vmul.f32 %v73, %v75
    %v77 = vadd.f32 %v73, %v76
    %vm78 = vweird.f32 %v73
    %v79 = vsel %vm78, %v73, %v77
    %v80 = vmul.f32 %v69, %v79
    %v81 = vmul.f32 %v72, %v79
    %v82 = vsub.f32 %v61, %v80
    %v83 = vsub.f32 %v62, %v81
    %v84 = vmul.f32 %v82, %v82
    %v85 = vmul.f32 %v83, %v83
    %v86 = vsel %vm66, %v84, 0.0
    %87 = vadd.xlane.f32.xlu0 %v86
    %v88 = vpop.xlane.xlu0 %87
    %v89 = vsel %vm66, %v85, 0.0
    %90 = vadd.xlane.f32.xlu0 %v89
    %v91 = vpop.xlane.xlu0 %90
    %v92 = vrcp.pop 31.0
    %v93 = vmul.f32 31.0, %v92
    %v94 = vsub.f32 1.0, %v93
    %v95 = vmul.f32 %v92, %v94
    %v96 = vadd.f32 %v92, %v95
    %vm97 = vweird.f32 %v92
    %v98 = vsel %vm97, %v92, %v96
    %v99 = vmul.f32 %v88, %v98
    %v100 = vmul.f32 %v91, %v98
    %v101 = vrsqrt.pop %v99
    %v102 = vmul.f32 %v101, %v99
    %v103 = vmul.f32 %v102, %v101
    %v104 = vmul.f32 0.5, %v103
    %v105 = vsub.f32 1.5, %v104
    %v106 = vmul.f32 %v101, %v105
    %v107 = vmul.f32 %v99, %v106
    %vm108 = vcmp.eq.f32.partialorder %v99, inf
    %v109 = vsel %vm108, %v99, %v107
    %vm110 = vcmp.eq.f32.partialorder %v99, 0.0
    %v111 = vand.u32 %v99, 2147483648
    %v112 = vsel %vm110, %v111, %v109
    %v113 = vrsqrt.pop %v100
    %v114 = vmul.f32 %v113, %v100
    %v115 = vmul.f32 %v114, %v113
    %v116 = vmul.f32 0.5, %v115
    %v117 = vsub.f32 1.5, %v116
    %v118 = vmul.f32 %v113, %v117
    %v119 = vmul.f32 %v100, %v118
    %vm120 = vcmp.eq.f32.partialorder %v100, inf
    %v121 = vsel %vm120, %v100, %v119
    %vm122 = vcmp.eq.f32.partialorder %v100, 0.0
    %v123 = vand.u32 %v100, 2147483648
    %v124 = vsel %vm122, %v123, %v121
    %v125 = vadd.f32 %v112, 1000000.0
    %v126 = vadd.f32 %v124, 1000000.0
    %v127 = vrcp.pop %v125
    %v128 = vrcp.pop %v126
    %v129 = vmul.f32 %v82, %v127
    %v130 = vmul.f32 %v83, %v128
    %v131 = vperm.slane %v63, 0
    %v132 = vmul.f32 %v131, %v129
    %v133 = vmul.f32 %v131, %v130
    %v134 = vperm.slane %v64, 0
    %v135 = vadd.f32 %v132, %v134
    %v136 = vadd.f32 %v133, %v134
    %v137 = vpack.c.bf16 %v136, %v135
    %v138 = vld [vmem:[#allocation7] sm:$0xf]
    %v139 = vld [vmem:[#allocation7 + $0x4] sm:$0xf]
    %v140 = vld [vmem:[#allocation7 + $0x8] sm:$0xf]
    %v141 = vld [vmem:[#allocation7 + $0xc] sm:$0xf]
    %v142 = vperm.slane %v65, 0
    %v147 = vunpack.c.l.b16 %v138
    %v148 = vunpack.c.l.b16 %v139
    %v149 = vunpack.c.l.b16 %v140
    %v150 = vunpack.c.l.b16 %v141
    %v151 = vpack.c.b16 %v148, %v147
    %v152 = vpack.c.b16 %v150, %v149
    %v156 = vsel %vm66, %v137, 0
    %158 = vmatpush.bf16.msra.mxu0 0
    %159 = vmatpush.bf16.msra.mxu0 0
    %160 = vmatpush.bf16.msra.mxu0 0
    %161 = vmatpush.bf16.msra.mxu0 0
    %162 = vmatpush.bf16.msra.mxu0 0
    %163 = vmatpush.bf16.msra.mxu0 0
    %164 = vmatpush.bf16.msra.mxu0 %v152
    %165 = vmatpush.bf16.msra.mxu0 %v151
    %166 = vmatmul.bf16.gmra.mxu0 %v156
    %v167 = vpop.f32.mrf.mxu0
    %v168 = vadd.f32 %v142, %v167
    %v169 = vpop.f32.mrf.mxu0
    %v170 = vadd.f32 %v142, %v169
    %171 = vdwg.mxu0
    %v172 = vadd.f32 %v61, %v168
    %v173 = vadd.f32 %v62, %v170
    %174 = vst.msk [vmem:[#allocation8] sm:$0xff] %vm66, %v172
    %175 = vst.msk [vmem:[#allocation8 + $0x8] sm:$0xff] %vm66, %v173
    // Predicated region
    $region26: #{tpu_custom_call.1} parent=1 // pred_check
      _
    $region27: #{tpu_custom_call.1} parent=1 // pred_check_branch
      %177 = sbr.rel (0) target = $region29
    $region28: #{tpu_custom_call.1} parent=1 // pred_region
      %179 = vsyncadd [#allocation4], 0
      %s180 = sshll.u32 [#allocation8], 4
      %s181 = int_to_ptr.vmem [resolvable:$true] %s180
      %s182 = sshll.u32 %s3, 4
      %s183 = int_to_ptr.hbm [resolvable:$true] %s182
      %188 = dma.vmem_to_hbm [thread:$0]  %s181, 256, %s183, [#allocation4], 128, 128, 8
    $region29: #{tpu_custom_call.1} parent=1 // pred_fallthru
      _
    // Predicated region
    $region30: #{tpu_custom_call.1} parent=1 // pred_check
      _
    $region31: #{tpu_custom_call.1} parent=1 // pred_check_branch
      %190 = sbr.rel (0) target = $region33
    $region32: #{tpu_custom_call.1} parent=1 // pred_region
      %192 = dma.done [#allocation4], 256
    $region33: #{tpu_custom_call.1} parent=1 // pred_fallthru
      _
    %193 = vsyncpa [#allocation3], 1
    %194 = vsyncpa [#allocation6], 1
    %195 = vsyncpa [#allocation4], 1

</llo_original>
